<compile_context>
chip_gen: v7x
topology: tpu7x:2x2x1
jax: 0.10.0
libtpu: 0.0.40
codegen_flags: <defaults>
</compile_context>

<pallas_src>
import functools

import jax
import jax.numpy as jnp
from jax.experimental import pallas as pl
from jax.experimental.pallas import tpu as pltpu


def _round_up(n, m):
    return ((n + m - 1) // m) * m


def _mlp_kernel(x_ref, w1_ref, b1_ref, w2_ref, b2_ref, w3_ref, b3_ref, o_ref):
    # x_ref: (TM, 180) bf16, streamed per grid step. All other refs are resident.
    x = x_ref[...]

    # fc1 + ReLU   (MXU, f32 accumulation; elementwise stays f32)
    h1 = jnp.dot(x, w1_ref[...], preferred_element_type=jnp.float32)
    h1 = jnp.maximum(h1 + b1_ref[...], 0.0)                      # (TM, 120) f32

    # fc2 + ReLU
    h2 = jnp.dot(h1.astype(jnp.bfloat16), w2_ref[...],
                 preferred_element_type=jnp.float32)
    h2 = jnp.maximum(h2 + b2_ref[...], 0.0)                      # (TM, 60) f32

    # fc3 (60 -> 1): VPU multiply + lane reduce; a 1-lane MXU matmul would use
    # <1% of the MXU.  Result is written lane-dense as (1, TM).
    h3 = jnp.sum(h2 * w3_ref[...], axis=-1)                      # (TM,) f32
    h3 = h3.reshape(1, -1) + b3_ref[...]                         # (1, TM) f32
    o_ref[...] = jax.nn.sigmoid(h3)


@functools.partial(jax.jit, static_argnames=("tm",))
def network_forward_pallas(x, params, *, tm=1024):
    """x: (B, 180) f32 -> (B, 1) f32 sigmoid probabilities via the Pallas kernel."""
    w1, b1, w2, b2, w3, b3 = params
    B = x.shape[0]

    # bf16 streaming for the HBM-heavy operands; accumulation stays f32 in-kernel.
    x_bf = x.astype(jnp.bfloat16)
    w1_bf = w1.astype(jnp.bfloat16)
    w2_bf = w2.astype(jnp.bfloat16)
    w3_row = w3.reshape(1, -1)          # (1, 60) row for the in-kernel VPU reduce

    # Lane-friendly batch tile (multiple of 128); pad the ragged last tile.
    tm = min(tm, _round_up(B, 128))
    b_pad = _round_up(B, tm)
    if b_pad != B:
        x_bf = jnp.pad(x_bf, ((0, b_pad - B), (0, 0)))
    n_tiles = b_pad // tm

    def resident(a):
        # Constant index_map: fetched once, stays in VMEM across all grid steps.
        return pl.BlockSpec(a.shape, lambda i: (0, 0))

    out = pl.pallas_call(
        _mlp_kernel,
        out_shape=jax.ShapeDtypeStruct((1, b_pad), jnp.float32),
        grid_spec=pltpu.PrefetchScalarGridSpec(
            num_scalar_prefetch=0,
            grid=(n_tiles,),
            in_specs=[
                pl.BlockSpec((tm, 180), lambda i: (i, 0)),       # x: streamed tiles
                resident(w1_bf), resident(b1),
                resident(w2_bf), resident(b2),
                resident(w3_row), resident(b3),
            ],
            out_specs=pl.BlockSpec((1, tm), lambda i: (0, i)),   # lane-dense output
        ),
        compiler_params=pltpu.CompilerParams(
            dimension_semantics=("parallel",),   # batch axis -> megacore on v7x
            vmem_limit_bytes=32 * 1024 * 1024,   # plenty of headroom for TM<=4096
        ),
    )(x_bf, w1_bf, b1, w2_bf, b2, w3_row, b3)

    return out[0, :B].reshape(B, 1)


def network_forward(x, params, *, min_pallas_batch=512):
    """Dispatcher: tiny batches use plain XLA (launch overhead dominates);
    larger batches stream through the Pallas kernel."""
    if x.shape[0] < min_pallas_batch:
        return reference_forward(x, params)
    return network_forward_pallas(x, params)


def init_params(key):
    """Deterministic init matching nn.Linear shapes (weights stored as [in, out])."""
    k1, k2, k3, k4, k5, k6 = jax.random.split(key, 6)

    def uinit(k, shape, fan_in):
        bound = 1.0 / jnp.sqrt(fan_in)
        return jax.random.uniform(k, shape, jnp.float32, -bound, bound)

    w1 = uinit(k1, (180, 120), 180)   # fc1: Linear(180, 120) -> W.T
    b1 = uinit(k2, (1, 120), 180)
    w2 = uinit(k3, (120, 60), 120)    # fc2: Linear(120, 60)
    b2 = uinit(k4, (1, 60), 120)
    w3 = uinit(k5, (60, 1), 60)       # fc3: Linear(60, 1)
    b3 = uinit(k6, (1, 1), 60)
    return (w1, b1, w2, b2, w3, b3)


def reference_forward(x, params):
    """Pure-f32 XLA reference (the module's exact forward)."""
    w1, b1, w2, b2, w3, b3 = params
    h = jnp.maximum(x @ w1 + b1, 0.0)
    h = jnp.maximum(h @ w2 + b2, 0.0)
    return jax.nn.sigmoid(h @ w3 + b3)


def reference_forward_bf16(x, params):
    """Reference using the same bf16-input / f32-accumulate math as the kernel."""
    w1, b1, w2, b2, w3, b3 = params
    xb = x.astype(jnp.bfloat16)
    h = jnp.dot(xb, w1.astype(jnp.bfloat16), preferred_element_type=jnp.float32)
    h = jnp.maximum(h + b1, 0.0)
    h = jnp.dot(h.astype(jnp.bfloat16), w2.astype(jnp.bfloat16),
                preferred_element_type=jnp.float32)
    h = jnp.maximum(h + b2, 0.0)
    return jax.nn.sigmoid(h @ w3 + b3)


if __name__ == "__main__":
    key = jax.random.PRNGKey(0)
    kx, kx2, kp = jax.random.split(key, 3)

    params = init_params(kp)

    # Small ragged batch driven straight through the Pallas path: 3 tiles of 128
    # rows (last tile padded), exercising the grid, resident weights and the
    # lane-dense output layout.
    B = 300
    x = jax.random.normal(kx, (B, 180), jnp.float32)
    out = jax.block_until_ready(network_forward_pallas(x, params, tm=128))
    assert out.shape == (B, 1)

    ref_match = reference_forward_bf16(x, params)   # same bf16/f32 math as kernel
    ref_f32 = reference_forward(x, params)          # pure-f32 module semantics
    assert jnp.allclose(out, ref_match, atol=1e-2, rtol=1e-2), (
        "mismatch vs bf16-matched reference: max |diff| = "
        f"{float(jnp.max(jnp.abs(out - ref_match)))}")
    assert jnp.allclose(out, ref_f32, atol=5e-2, rtol=5e-2), (
        "mismatch vs f32 reference: max |diff| = "
        f"{float(jnp.max(jnp.abs(out - ref_f32)))}")

    # Tiny batch takes the plain-XLA fast path of the dispatcher.
    x_small = jax.random.normal(kx2, (8, 180), jnp.float32)
    out_small = jax.block_until_ready(network_forward(x_small, params))
    assert out_small.shape == (8, 1)

    print("KERNEL_OK")
</pallas_src>

<mosaic_0001>
module attributes {stable_mosaic.version = 11 : i64} {
  func.func @_mlp_kernel(%arg0: i32, %arg1: memref<128x180xbf16, #tpu.memory_space<vmem>>, %arg2: memref<180x120xbf16, #tpu.memory_space<vmem>>, %arg3: memref<1x120xf32, #tpu.memory_space<vmem>>, %arg4: memref<120x60xbf16, #tpu.memory_space<vmem>>, %arg5: memref<1x60xf32, #tpu.memory_space<vmem>>, %arg6: memref<1x60xf32, #tpu.memory_space<vmem>>, %arg7: memref<1x1xf32, #tpu.memory_space<vmem>>, %arg8: memref<1x128xf32, #tpu.memory_space<vmem>>) attributes {dimension_semantics = [#tpu.dimension_semantics<parallel>], iteration_bounds = array<i64: 3>, scalar_prefetch = 0 : i64, scratch_operands = 0 : i64, tpu.core_type = #tpu.core_type<tc>, window_params = [{transform_indices = @transform_0, window_bounds = array<i64: 128, 180>}, {pipeline_mode = #tpu.pipeline_mode<synchronous>, transform_indices = @transform_1, window_bounds = array<i64: 180, 120>}, {pipeline_mode = #tpu.pipeline_mode<synchronous>, transform_indices = @transform_2, window_bounds = array<i64: 1, 120>}, {pipeline_mode = #tpu.pipeline_mode<synchronous>, transform_indices = @transform_3, window_bounds = array<i64: 120, 60>}, {pipeline_mode = #tpu.pipeline_mode<synchronous>, transform_indices = @transform_4, window_bounds = array<i64: 1, 60>}, {pipeline_mode = #tpu.pipeline_mode<synchronous>, transform_indices = @transform_5, window_bounds = array<i64: 1, 60>}, {pipeline_mode = #tpu.pipeline_mode<synchronous>, transform_indices = @transform_6, window_bounds = array<i64: 1, 1>}, {transform_indices = @transform_7, window_bounds = array<i64: 1, 128>}]} {
    %c0 = arith.constant 0 : index
    %c0_0 = arith.constant 0 : index
    %0 = vector.load %arg1[%c0, %c0_0] : memref<128x180xbf16, #tpu.memory_space<vmem>>, vector<128x180xbf16>
    %c0_1 = arith.constant 0 : index
    %c0_2 = arith.constant 0 : index
    %1 = vector.load %arg2[%c0_1, %c0_2] : memref<180x120xbf16, #tpu.memory_space<vmem>>, vector<180x120xbf16>
    %cst = arith.constant dense<0.000000e+00> : vector<128x120xf32>
    %2 = tpu.matmul %0, %1, %cst {dimension_numbers = #tpu.dot_dimension_numbers<[1], [0], [0], [1], [0, 0, 1, 1], [], []>} : vector<128x180xbf16>, vector<180x120xbf16>, vector<128x120xf32> -> vector<128x120xf32>
    %c0_3 = arith.constant 0 : index
    %c0_4 = arith.constant 0 : index
    %3 = vector.load %arg3[%c0_3, %c0_4] : memref<1x120xf32, #tpu.memory_space<vmem>>, vector<1x120xf32>
    %4 = vector.broadcast %3 : vector<1x120xf32> to vector<128x120xf32>
    %5 = arith.addf %2, %4 : vector<128x120xf32>
    %cst_5 = arith.constant 0.000000e+00 : f32
    %6 = vector.broadcast %cst_5 : f32 to vector<128x120xf32>
    %7 = arith.maximumf %5, %6 : vector<128x120xf32>
    %8 = arith.truncf %7 : vector<128x120xf32> to vector<128x120xbf16>
    %c0_6 = arith.constant 0 : index
    %c0_7 = arith.constant 0 : index
    %9 = vector.load %arg4[%c0_6, %c0_7] : memref<120x60xbf16, #tpu.memory_space<vmem>>, vector<120x60xbf16>
    %cst_8 = arith.constant dense<0.000000e+00> : vector<128x60xf32>
    %10 = tpu.matmul %8, %9, %cst_8 {dimension_numbers = #tpu.dot_dimension_numbers<[1], [0], [0], [1], [0, 0, 1, 1], [], []>} : vector<128x120xbf16>, vector<120x60xbf16>, vector<128x60xf32> -> vector<128x60xf32>
    %c0_9 = arith.constant 0 : index
    %c0_10 = arith.constant 0 : index
    %11 = vector.load %arg5[%c0_9, %c0_10] : memref<1x60xf32, #tpu.memory_space<vmem>>, vector<1x60xf32>
    %12 = vector.broadcast %11 : vector<1x60xf32> to vector<128x60xf32>
    %13 = arith.addf %10, %12 : vector<128x60xf32>
    %cst_11 = arith.constant 0.000000e+00 : f32
    %14 = vector.broadcast %cst_11 : f32 to vector<128x60xf32>
    %15 = arith.maximumf %13, %14 : vector<128x60xf32>
    %c0_12 = arith.constant 0 : index
    %c0_13 = arith.constant 0 : index
    %16 = vector.load %arg6[%c0_12, %c0_13] : memref<1x60xf32, #tpu.memory_space<vmem>>, vector<1x60xf32>
    %17 = vector.broadcast %16 : vector<1x60xf32> to vector<128x60xf32>
    %18 = arith.mulf %15, %17 : vector<128x60xf32>
    %cst_14 = arith.constant dense<0.000000e+00> : vector<128xf32>
    %19 = vector.multi_reduction <add>, %18, %cst_14 [1] : vector<128x60xf32> to vector<128xf32>
    %20 = vector.shape_cast %19 : vector<128xf32> to vector<1x128xf32>
    %c0_15 = arith.constant 0 : index
    %c0_16 = arith.constant 0 : index
    %21 = vector.load %arg7[%c0_15, %c0_16] : memref<1x1xf32, #tpu.memory_space<vmem>>, vector<1x1xf32>
    %22 = vector.broadcast %21 : vector<1x1xf32> to vector<1x128xf32>
    %23 = arith.addf %20, %22 : vector<1x128xf32>
    %24 = arith.negf %23 : vector<1x128xf32>
    %25 = math.exp %24 : vector<1x128xf32>
    %cst_17 = arith.constant 1.000000e+00 : f32
    %26 = vector.broadcast %cst_17 : f32 to vector<1x128xf32>
    %27 = arith.addf %26, %25 : vector<1x128xf32>
    %28 = arith.divf %26, %27 : vector<1x128xf32>
    %c0_18 = arith.constant 0 : index
    %c0_19 = arith.constant 0 : index
    %29 = vector.load %arg8[%c0_18, %c0_19] : memref<1x128xf32, #tpu.memory_space<vmem>>, vector<1x128xf32>
    tpu.vector_store %arg8[%c0_18, %c0_19], %28 {strides = array<i32>} : memref<1x128xf32, #tpu.memory_space<vmem>>, vector<1x128xf32>,
    return
  }
  func.func @transform_0(%arg0: i32) -> (i32, i32) {
    %c0_i32 = arith.constant 0 : i32
    %c0_i32_0 = arith.constant 0 : i32
    return %arg0, %c0_i32 : i32, i32
  }
  func.func @transform_1(%arg0: i32) -> (i32, i32) {
    %c0_i32 = arith.constant 0 : i32
    %c0_i32_0 = arith.constant 0 : i32
    %c0_i32_1 = arith.constant 0 : i32
    return %c0_i32, %c0_i32_0 : i32, i32
  }
  func.func @transform_2(%arg0: i32) -> (i32, i32) {
    %c0_i32 = arith.constant 0 : i32
    %c0_i32_0 = arith.constant 0 : i32
    %c0_i32_1 = arith.constant 0 : i32
    return %c0_i32, %c0_i32_0 : i32, i32
  }
  func.func @transform_3(%arg0: i32) -> (i32, i32) {
    %c0_i32 = arith.constant 0 : i32
    %c0_i32_0 = arith.constant 0 : i32
    %c0_i32_1 = arith.constant 0 : i32
    return %c0_i32, %c0_i32_0 : i32, i32
  }
  func.func @transform_4(%arg0: i32) -> (i32, i32) {
    %c0_i32 = arith.constant 0 : i32
    %c0_i32_0 = arith.constant 0 : i32
    %c0_i32_1 = arith.constant 0 : i32
    return %c0_i32, %c0_i32_0 : i32, i32
  }
  func.func @transform_5(%arg0: i32) -> (i32, i32) {
    %c0_i32 = arith.constant 0 : i32
    %c0_i32_0 = arith.constant 0 : i32
    %c0_i32_1 = arith.constant 0 : i32
    return %c0_i32, %c0_i32_0 : i32, i32
  }
  func.func @transform_6(%arg0: i32) -> (i32, i32) {
    %c0_i32 = arith.constant 0 : i32
    %c0_i32_0 = arith.constant 0 : i32
    %c0_i32_1 = arith.constant 0 : i32
    return %c0_i32, %c0_i32_0 : i32, i32
  }
  func.func @transform_7(%arg0: i32) -> (i32, i32) {
    %c0_i32 = arith.constant 0 : i32
    %c0_i32_0 = arith.constant 0 : i32
    return %c0_i32, %arg0 : i32, i32
  }
}

</mosaic_0001>

<llo_original>
// kernel: network_forward_pallas.1
$region0: #{network_forward_pallas.1}
  #allocation0 [shape = 'u32[]', space=smem, size = 0x4, offset = 0x4, fixed_abs, tag = 'smem constant byte address 0x4 - core index']
  #allocation1 [shape = 'u32[144,128]{1,0:T(1,128)}', space=vmem, size = 0x12000, scoped, tag = 'internal scratch']
  #allocation2 [shape = 'f32[1,1]{1,0:T(1,128)S(1)}', space=vmem, size = 0x200, scoped, tag = 'scoped memory for network_forward_pallas.1']
  %s0 = inlined_call_operand.vmem [shape: bf16[384,180], index: 0, kind: input, shape index: {}]
  %s1 = inlined_call_operand.vmem [shape: bf16[180,120], index: 1, kind: input, shape index: {}]
  %s2 = inlined_call_operand.vmem [shape: f32[1,120], index: 2, kind: input, shape index: {}]
  %s3 = inlined_call_operand.vmem [shape: bf16[120,60], index: 3, kind: input, shape index: {}]
  %s4 = inlined_call_operand.vmem [shape: f32[1,60], index: 4, kind: input, shape index: {}]
  %s5 = inlined_call_operand.vmem [shape: f32[1,60], index: 5, kind: input, shape index: {}]
  %s6 = inlined_call_operand.<no memory space> [shape: f32[1,1], index: 6, kind: input, shape index: {}]
  %s7 = inlined_call_operand.vmem [shape: f32[1,384], index: 7, kind: output, shape index: {}]
  %s8 = sld [smem:[#allocation0]]
  $region61: #{network_forward_pallas.1} parent=0
    _
  %s10 = ssub.s32 1, %s8
  %s11 = scalar_select 0, %s10, %s8
  %v12 = vstv %s6
  %13 = vst [vmem:[#allocation2] sm:$0x1] %v12
  loop: start=0, step=1, limit=5
  $region2: #{network_forward_pallas.1} parent=0 // loop_pre_header
    _
  $region3: #{network_forward_pallas.1} parent=0 // loop_header
    %s15 = sphi 0, %s19
    %p16 = scmp.ge.s32.totalorder %s15, 5
    %s25 = sphi 0, %s27
    %s28 = sphi 0, %s25
    %s29 = sphi 0, %s28
    %s45 = sphi 0, %s29
    %s49 = sphi 0, %s49
    %s51 = sphi 0, %s49
    %s52 = sphi 0, %s51
    %s66 = sphi 0, %s52
    %s70 = sphi 0, %s70
    %s72 = sphi 0, %s70
    %s73 = sphi 0, %s72
    %s87 = sphi 0, %s73
    %s91 = sphi 0, %s91
    %s93 = sphi 0, %s91
    %s94 = sphi 0, %s93
    %s108 = sphi 0, %s94
    %s112 = sphi 0, %s112
    %s114 = sphi 0, %s112
    %s115 = sphi 0, %s114
    %s129 = sphi 0, %s115
    %s133 = sphi 0, %s133
    %s135 = sphi 0, %s133
    %s136 = sphi 0, %s135
    %s150 = sphi 0, %s136
    %s154 = sphi 0, %s154
    %s156 = sphi 0, %s154
    %s157 = sphi 0, %s156
    %s171 = sphi 0, %s157
    %s177 = sphi 0, %s179
    %s180 = sphi 0, %s177
    %s181 = sphi 0, %s180
    %s197 = sphi 0, %s181
  $region4: #{network_forward_pallas.1} parent=0 // loop_header_branch
    %18 = sbr.rel (%p16) target = $region8
  $region5: #{network_forward_pallas.1} parent=0 // loop_body
    %s20 = ssub.s32 %s15, 1
    %s21 = ssub.s32 %s15, 2
    %s22 = sadd.s32 %s15, 1
    %s23 = ssub.s32 %s15, %s22
    %p24 = scmp.eq.s32.totalorder %s23, 0
    %s26 = sadd.s32 %s25, 1
    %s27 = scalar_select %p24, %s25, %s26
    %p30 = pneg %p24
    %p31 = scmp.eq.s32.totalorder %s15, 2
    %p32 = por %p30, %p31
    %p33 = scmp.ne.s32.totalorder %s25, %s28
    %p34 = scmp.eq.s32.totalorder %s15, 0
    %p35 = por %p33, %p34
    %p36 = scmp.ne.s32.totalorder %s25, %s28
    %p37 = scmp.eq.s32.totalorder %s20, 2
    %p38 = por %p36, %p37
    %p39 = scmp.ne.s32.totalorder %s28, %s29
    %p40 = scmp.eq.s32.totalorder %s20, 0
    %p41 = por %p39, %p40
    %p42 = scmp.ne.s32.totalorder %s28, %s29
    %p43 = scmp.eq.s32.totalorder %s21, 2
    %p44 = por %p42, %p43
    %p46 = scmp.ne.s32.totalorder %s29, %s45
    %p47 = scmp.eq.s32.totalorder %s21, 0
    %p48 = por %p46, %p47
    %s50 = sadd.s32 %s49, 1
    %p53 = scmp.eq.s32.totalorder %s15, 2
    %p54 = scmp.ne.s32.totalorder %s49, %s51
    %p55 = scmp.eq.s32.totalorder %s15, 0
    %p56 = por %p54, %p55
    %p57 = scmp.ne.s32.totalorder %s49, %s51
    %p58 = scmp.eq.s32.totalorder %s20, 2
    %p59 = por %p57, %p58
    %p60 = scmp.ne.s32.totalorder %s51, %s52
    %p61 = scmp.eq.s32.totalorder %s20, 0
    %p62 = por %p60, %p61
    %p63 = scmp.ne.s32.totalorder %s51, %s52
    %p64 = scmp.eq.s32.totalorder %s21, 2
    %p65 = por %p63, %p64
    %p67 = scmp.ne.s32.totalorder %s52, %s66
    %p68 = scmp.eq.s32.totalorder %s21, 0
    %p69 = por %p67, %p68
    %s71 = sadd.s32 %s70, 1
    %p74 = scmp.eq.s32.totalorder %s15, 2
    %p75 = scmp.ne.s32.totalorder %s70, %s72
    %p76 = scmp.eq.s32.totalorder %s15, 0
    %p77 = por %p75, %p76
    %p78 = scmp.ne.s32.totalorder %s70, %s72
    %p79 = scmp.eq.s32.totalorder %s20, 2
    %p80 = por %p78, %p79
    %p81 = scmp.ne.s32.totalorder %s72, %s73
    %p82 = scmp.eq.s32.totalorder %s20, 0
    %p83 = por %p81, %p82
    %p84 = scmp.ne.s32.totalorder %s72, %s73
    %p85 = scmp.eq.s32.totalorder %s21, 2
    %p86 = por %p84, %p85
    %p88 = scmp.ne.s32.totalorder %s73, %s87
    %p89 = scmp.eq.s32.totalorder %s21, 0
    %p90 = por %p88, %p89
    %s92 = sadd.s32 %s91, 1
    %p95 = scmp.eq.s32.totalorder %s15, 2
    %p96 = scmp.ne.s32.totalorder %s91, %s93
    %p97 = scmp.eq.s32.totalorder %s15, 0
    %p98 = por %p96, %p97
    %p99 = scmp.ne.s32.totalorder %s91, %s93
    %p100 = scmp.eq.s32.totalorder %s20, 2
    %p101 = por %p99, %p100
    %p102 = scmp.ne.s32.totalorder %s93, %s94
    %p103 = scmp.eq.s32.totalorder %s20, 0
    %p104 = por %p102, %p103
    %p105 = scmp.ne.s32.totalorder %s93, %s94
    %p106 = scmp.eq.s32.totalorder %s21, 2
    %p107 = por %p105, %p106
    %p109 = scmp.ne.s32.totalorder %s94, %s108
    %p110 = scmp.eq.s32.totalorder %s21, 0
    %p111 = por %p109, %p110
    %s113 = sadd.s32 %s112, 1
    %p116 = scmp.eq.s32.totalorder %s15, 2
    %p117 = scmp.ne.s32.totalorder %s112, %s114
    %p118 = scmp.eq.s32.totalorder %s15, 0
    %p119 = por %p117, %p118
    %p120 = scmp.ne.s32.totalorder %s112, %s114
    %p121 = scmp.eq.s32.totalorder %s20, 2
    %p122 = por %p120, %p121
    %p123 = scmp.ne.s32.totalorder %s114, %s115
    %p124 = scmp.eq.s32.totalorder %s20, 0
    %p125 = por %p123, %p124
    %p126 = scmp.ne.s32.totalorder %s114, %s115
    %p127 = scmp.eq.s32.totalorder %s21, 2
    %p128 = por %p126, %p127
    %p130 = scmp.ne.s32.totalorder %s115, %s129
    %p131 = scmp.eq.s32.totalorder %s21, 0
    %p132 = por %p130, %p131
    %s134 = sadd.s32 %s133, 1
    %p137 = scmp.eq.s32.totalorder %s15, 2
    %p138 = scmp.ne.s32.totalorder %s133, %s135
    %p139 = scmp.eq.s32.totalorder %s15, 0
    %p140 = por %p138, %p139
    %p141 = scmp.ne.s32.totalorder %s133, %s135
    %p142 = scmp.eq.s32.totalorder %s20, 2
    %p143 = por %p141, %p142
    %p144 = scmp.ne.s32.totalorder %s135, %s136
    %p145 = scmp.eq.s32.totalorder %s20, 0
    %p146 = por %p144, %p145
    %p147 = scmp.ne.s32.totalorder %s135, %s136
    %p148 = scmp.eq.s32.totalorder %s21, 2
    %p149 = por %p147, %p148
    %p151 = scmp.ne.s32.totalorder %s136, %s150
    %p152 = scmp.eq.s32.totalorder %s21, 0
    %p153 = por %p151, %p152
    %s155 = sadd.s32 %s154, 1
    %p158 = scmp.eq.s32.totalorder %s15, 2
    %p159 = scmp.ne.s32.totalorder %s154, %s156
    %p160 = scmp.eq.s32.totalorder %s15, 0
    %p161 = por %p159, %p160
    %p162 = scmp.ne.s32.totalorder %s154, %s156
    %p163 = scmp.eq.s32.totalorder %s20, 2
    %p164 = por %p162, %p163
    %p165 = scmp.ne.s32.totalorder %s156, %s157
    %p166 = scmp.eq.s32.totalorder %s20, 0
    %p167 = por %p165, %p166
    %p168 = scmp.ne.s32.totalorder %s156, %s157
    %p169 = scmp.eq.s32.totalorder %s21, 2
    %p170 = por %p168, %p169
    %p172 = scmp.ne.s32.totalorder %s157, %s171
    %p173 = scmp.eq.s32.totalorder %s21, 0
    %p174 = por %p172, %p173
    %s175 = ssub.s32 %s15, %s22
    %p176 = scmp.eq.s32.totalorder %s175, 0
    %s178 = sadd.s32 %s177, 1
    %s179 = scalar_select %p176, %s177, %s178
    %p182 = pneg %p176
    %p183 = scmp.eq.s32.totalorder %s15, 2
    %p184 = por %p182, %p183
    %p185 = scmp.ne.s32.totalorder %s177, %s180
    %p186 = scmp.eq.s32.totalorder %s15, 0
    %p187 = por %p185, %p186
    %p188 = scmp.ne.s32.totalorder %s177, %s180
    %p189 = scmp.eq.s32.totalorder %s20, 2
    %p190 = por %p188, %p189
    %p191 = scmp.ne.s32.totalorder %s180, %s181
    %p192 = scmp.eq.s32.totalorder %s20, 0
    %p193 = por %p191, %p192
    %p194 = scmp.ne.s32.totalorder %s180, %s181
    %p195 = scmp.eq.s32.totalorder %s21, 2
    %p196 = por %p194, %p195
    %p198 = scmp.ne.s32.totalorder %s181, %s197
    %p199 = scmp.eq.s32.totalorder %s21, 0
    %p200 = por %p198, %p199
    %p201 = scmp.le.s32.totalorder 1, %s15
    %p202 = scmp.lt.s32.totalorder %s15, 4
    %p203 = pnand %p201, %p202
    %p204 = pneg %p203
    // Predicated region
    $region9: #{network_forward_pallas.1} parent=5 // pred_check
      _
    $region10: #{network_forward_pallas.1} parent=5 // pred_check_branch
      %206 = sbr.rel (%p203) target = $region12
    $region11: #{network_forward_pallas.1} parent=5 // pred_region
      %s207 = ssub.s32 %s15, 1
      // Predicated region
      $region13: #{network_forward_pallas.1} parent=11 // pred_check
        %p208 = pneg %p62
      $region14: #{network_forward_pallas.1} parent=11 // pred_check_branch
        %210 = sbr.rel (%p208) target = $region16
      $region15: #{network_forward_pallas.1} parent=11 // pred_region
        _
      $region16: #{network_forward_pallas.1} parent=11 // pred_fallthru
        _
      // Predicated region
      $region17: #{network_forward_pallas.1} parent=11 // pred_check
        %p211 = pneg %p83
      $region18: #{network_forward_pallas.1} parent=11 // pred_check_branch
        %213 = sbr.rel (%p211) target = $region20
      $region19: #{network_forward_pallas.1} parent=11 // pred_region
        _
      $region20: #{network_forward_pallas.1} parent=11 // pred_fallthru
        _
      // Predicated region
      $region21: #{network_forward_pallas.1} parent=11 // pred_check
        %p214 = pneg %p104
      $region22: #{network_forward_pallas.1} parent=11 // pred_check_branch
        %216 = sbr.rel (%p214) target = $region24
      $region23: #{network_forward_pallas.1} parent=11 // pred_region
        _
      $region24: #{network_forward_pallas.1} parent=11 // pred_fallthru
        _
      // Predicated region
      $region25: #{network_forward_pallas.1} parent=11 // pred_check
        %p217 = pneg %p125
      $region26: #{network_forward_pallas.1} parent=11 // pred_check_branch
        %219 = sbr.rel (%p217) target = $region28
      $region27: #{network_forward_pallas.1} parent=11 // pred_region
        _
      $region28: #{network_forward_pallas.1} parent=11 // pred_fallthru
        _
      // Predicated region
      $region29: #{network_forward_pallas.1} parent=11 // pred_check
        %p220 = pneg %p146
      $region30: #{network_forward_pallas.1} parent=11 // pred_check_branch
        %222 = sbr.rel (%p220) target = $region32
      $region31: #{network_forward_pallas.1} parent=11 // pred_region
        _
      $region32: #{network_forward_pallas.1} parent=11 // pred_fallthru
        _
      // Predicated region
      $region33: #{network_forward_pallas.1} parent=11 // pred_check
        %p223 = pneg %p167
      $region34: #{network_forward_pallas.1} parent=11 // pred_check_branch
        %225 = sbr.rel (%p223) target = $region36
      $region35: #{network_forward_pallas.1} parent=11 // pred_region
        _
      $region36: #{network_forward_pallas.1} parent=11 // pred_fallthru
        _
    $region12: #{network_forward_pallas.1} parent=5 // pred_fallthru
      _
    %p226 = scmp.lt.s32.totalorder %s15, 3
    // Predicated region
    $region37: #{network_forward_pallas.1} parent=5 // pred_check
      %p227 = pneg %p226
    $region38: #{network_forward_pallas.1} parent=5 // pred_check_branch
      %229 = sbr.rel (%p227) target = $region40
    $region39: #{network_forward_pallas.1} parent=5 // pred_region
      // Predicated region
      $region41: #{network_forward_pallas.1} parent=39 // pred_check
        %p230 = pneg %p35
      $region42: #{network_forward_pallas.1} parent=39 // pred_check_branch
        %232 = sbr.rel (%p230) target = $region44
      $region43: #{network_forward_pallas.1} parent=39 // pred_region
        %s233 = smul.u32 16, %s15
        %p234 = scmp.lt.s32.totalorder %s233, 47
        %s235 = scalar_select %p234, %s233, 47
        %s236 = smul.addr %s235, 2
        %s237 = smul.addr %s236, 4
        %s238 = scalar_lea.vmem %s0, %s237
        %s239 = smul.u32 16, %s15
      $region44: #{network_forward_pallas.1} parent=39 // pred_fallthru
        _
    $region40: #{network_forward_pallas.1} parent=5 // pred_fallthru
      _
    %p240 = scmp.le.s32.totalorder 1, %s15
    %p241 = scmp.lt.s32.totalorder %s15, 4
    %p242 = pnand %p240, %p241
    %p243 = pneg %p242
    // Predicated region
    $region45: #{network_forward_pallas.1} parent=5 // pred_check
      _
    $region46: #{network_forward_pallas.1} parent=5 // pred_check_branch
      %245 = sbr.rel (%p242) target = $region48
    $region47: #{network_forward_pallas.1} parent=5 // pred_region
      %s246 = ssub.s32 %s15, 1
      %s247 = smul.u32 16, %s20
      %p248 = scmp.lt.s32.totalorder %s247, 47
      %s249 = scalar_select %p248, %s247, 47
      %s250 = smul.addr %s249, 2
      %s251 = smul.addr %s250, 4
      %s252 = scalar_lea.vmem %s0, %s251
      %p253 = pneg %p41
      %p254 = pneg %p38
      %p255 = pneg %p62
      %p256 = pneg %p59
      %p257 = pneg %p83
      %p258 = pneg %p80
      %p259 = pneg %p104
      %p260 = pneg %p101
      %p261 = pneg %p125
      %p262 = pneg %p122
      %p263 = pneg %p146
      %p264 = pneg %p143
      %p265 = pneg %p167
      %p266 = pneg %p164
      %p267 = pneg %p193
      %p268 = pneg %p190
      %p269 = scmp.lt.s32.totalorder %s20, 2
      %s270 = scalar_select %p269, %s20, 2
      %s271 = scalar_lea.vmem %s7, %s270
      %s272 = smul.u32 16, %s20
      %p273 = scmp.lt.s32.totalorder %s272, 47
      %s274 = scalar_select %p273, %s272, 47
      %s275 = smul.addr %s274, 2
      %s276 = smul.addr %s275, 4
      %s277 = scalar_lea.vmem %s0, %s276
      %s278 = smul.u32 16, %s20
      %p279 = scmp.lt.s32.totalorder %s20, 2
      %s280 = scalar_select %p279, %s20, 2
      %s281 = scalar_lea.vmem %s7, %s280
      %v283 = vld [vmem:[%s277] sm:$0xff]
      %v284 = vld [vmem:[%s277 + $0x8] sm:$0xff]
      %v285 = vld [vmem:[%s277 + $0x10] sm:$0xff]
      %v286 = vld [vmem:[%s277 + $0x18] sm:$0xff]
      %v287 = vld [vmem:[%s277 + $0x20] sm:$0xff]
      %v288 = vld [vmem:[%s277 + $0x28] sm:$0xff]
      %v289 = vld [vmem:[%s277 + $0x30] sm:$0xff]
      %v290 = vld [vmem:[%s277 + $0x38] sm:$0xff]
      %v291 = vld [vmem:[%s277 + $0x40] sm:$0xff]
      %v292 = vld [vmem:[%s277 + $0x48] sm:$0xff]
      %v293 = vld [vmem:[%s277 + $0x50] sm:$0xff]
      %v294 = vld [vmem:[%s277 + $0x58] sm:$0xff]
      %v295 = vld [vmem:[%s277 + $0x60] sm:$0xff]
      %v296 = vld [vmem:[%s277 + $0x68] sm:$0xff]
      %v297 = vld [vmem:[%s277 + $0x70] sm:$0xff]
      %v298 = vld [vmem:[%s277 + $0x78] sm:$0xff]
      %v299 = vld [vmem:[%s1] sm:$0xf]
      %v300 = vld [vmem:[%s1 + $0x4] sm:$0xf]
      %v301 = vld [vmem:[%s1 + $0x8] sm:$0xf]
      %v302 = vld [vmem:[%s1 + $0xc] sm:$0xf]
      %v303 = vld [vmem:[%s1 + $0x10] sm:$0xf]
      %v304 = vld [vmem:[%s1 + $0x14] sm:$0xf]
      %v305 = vld [vmem:[%s1 + $0x18] sm:$0xf]
      %v306 = vld [vmem:[%s1 + $0x1c] sm:$0xf]
      %v307 = vld [vmem:[%s1 + $0x20] sm:$0xf]
      %v308 = vld [vmem:[%s1 + $0x24] sm:$0xf]
      %v309 = vld [vmem:[%s1 + $0x28] sm:$0xf]
      %v310 = vld [vmem:[%s1 + $0x2c] sm:$0xf]
      %v311 = vld [vmem:[%s1 + $0x30] sm:$0xf]
      %v312 = vld [vmem:[%s1 + $0x34] sm:$0xf]
      %v313 = vld [vmem:[%s1 + $0x38] sm:$0xf]
      %v314 = vld [vmem:[%s1 + $0x3c] sm:$0xf]
      %v315 = vld [vmem:[%s1 + $0x40] sm:$0xf]
      %v316 = vld [vmem:[%s1 + $0x44] sm:$0xf]
      %v317 = vld [vmem:[%s1 + $0x48] sm:$0xf]
      %v318 = vld [vmem:[%s1 + $0x4c] sm:$0xf]
      %v319 = vld [vmem:[%s1 + $0x50] sm:$0xf]
      %v320 = vld [vmem:[%s1 + $0x54] sm:$0xf]
      %v321 = vld [vmem:[%s1 + $0x58] sm:$0x3]
      %v322 = vld [vmem:[%s2] sm:$0x1]
      %v324 = vlaneseq
      %v325 = vshrl.u32 %v324, 7
      %v326 = vsub.s32 0, %v325
      %v327 = vrot.slane %v322, %v326
      %v345 = vunpack.c.l.b16 %v283
      %v346 = vunpack.c.h.b16 %v283
      %v347 = vunpack.c.l.b16 %v284
      %v348 = vunpack.c.h.b16 %v284
      %v349 = vunpack.c.l.b16 %v285
      %v350 = vunpack.c.h.b16 %v285
      %v351 = vunpack.c.l.b16 %v286
      %v352 = vunpack.c.h.b16 %v286
      %v353 = vunpack.c.l.b16 %v287
      %v354 = vunpack.c.h.b16 %v287
      %v355 = vunpack.c.l.b16 %v288
      %v356 = vunpack.c.h.b16 %v288
      %v357 = vunpack.c.l.b16 %v289
      %v358 = vunpack.c.h.b16 %v289
      %v359 = vunpack.c.l.b16 %v290
      %v360 = vunpack.c.h.b16 %v290
      %v361 = vunpack.c.l.b16 %v291
      %v362 = vunpack.c.h.b16 %v291
      %v363 = vunpack.c.l.b16 %v292
      %v364 = vunpack.c.h.b16 %v292
      %v365 = vunpack.c.l.b16 %v293
      %v366 = vunpack.c.h.b16 %v293
      %v367 = vunpack.c.l.b16 %v294
      %v368 = vunpack.c.h.b16 %v294
      %v369 = vunpack.c.l.b16 %v295
      %v370 = vunpack.c.h.b16 %v295
      %v371 = vunpack.c.l.b16 %v296
      %v372 = vunpack.c.h.b16 %v296
      %v373 = vunpack.c.l.b16 %v297
      %v374 = vunpack.c.h.b16 %v297
      %v375 = vunpack.c.l.b16 %v298
      %v376 = vunpack.c.h.b16 %v298
      %v377 = vpack.c.b16 %v347, %v345
      %v378 = vpack.c.b16 %v348, %v346
      %v379 = vpack.c.b16 %v351, %v349
      %v380 = vpack.c.b16 %v352, %v350
      %v381 = vpack.c.b16 %v355, %v353
      %v382 = vpack.c.b16 %v356, %v354
      %v383 = vpack.c.b16 %v359, %v357
      %v384 = vpack.c.b16 %v360, %v358
      %v385 = vpack.c.b16 %v363, %v361
      %v386 = vpack.c.b16 %v364, %v362
      %v387 = vpack.c.b16 %v367, %v365
      %v388 = vpack.c.b16 %v368, %v366
      %v389 = vpack.c.b16 %v371, %v369
      %v390 = vpack.c.b16 %v372, %v370
      %v391 = vpack.c.b16 %v375, %v373
      %v392 = vpack.c.b16 %v376, %v374
      %v424 = vunpack.c.l.b16 %v299
      %v425 = vunpack.c.l.b16 %v300
      %v426 = vunpack.c.l.b16 %v301
      %v427 = vunpack.c.l.b16 %v302
      %v428 = vunpack.c.l.b16 %v303
      %v429 = vunpack.c.l.b16 %v304
      %v430 = vunpack.c.l.b16 %v305
      %v431 = vunpack.c.l.b16 %v306
      %v432 = vunpack.c.l.b16 %v307
      %v433 = vunpack.c.l.b16 %v308
      %v434 = vunpack.c.l.b16 %v309
      %v435 = vunpack.c.l.b16 %v310
      %v436 = vunpack.c.l.b16 %v311
      %v437 = vunpack.c.l.b16 %v312
      %v438 = vunpack.c.l.b16 %v313
      %v439 = vunpack.c.l.b16 %v314
      %v440 = vunpack.c.l.b16 %v315
      %v441 = vunpack.c.l.b16 %v316
      %v442 = vunpack.c.l.b16 %v317
      %v443 = vunpack.c.l.b16 %v318
      %v444 = vunpack.c.l.b16 %v319
      %v445 = vunpack.c.l.b16 %v320
      %v446 = vunpack.c.l.b16 %v321
      %v447 = vpack.c.b16 %v425, %v424
      %v448 = vpack.c.b16 %v427, %v426
      %v449 = vpack.c.b16 %v429, %v428
      %v450 = vpack.c.b16 %v431, %v430
      %v451 = vpack.c.b16 %v433, %v432
      %v452 = vpack.c.b16 %v435, %v434
      %v453 = vpack.c.b16 %v437, %v436
      %v454 = vpack.c.b16 %v439, %v438
      %v455 = vpack.c.b16 %v441, %v440
      %v456 = vpack.c.b16 %v443, %v442
      %v457 = vpack.c.b16 %v445, %v444
      %v458 = vpack.c.b16 %v446, %v446
      %vm470 = vcmask 424960
      %v472 = vsel %vm470, %v378, 0
      %v475 = vsel %vm470, %v380, 0
      %v478 = vsel %vm470, %v382, 0
      %v481 = vsel %vm470, %v384, 0
      %v484 = vsel %vm470, %v386, 0
      %v487 = vsel %vm470, %v388, 0
      %v490 = vsel %vm470, %v390, 0
      %v493 = vsel %vm470, %v392, 0
      %vm495 = vcmask 1041408
      %v497 = vsel %vm495, %v458, 0
      %499 = vmatprep.subr.bf16.mxu0 0
      %500 = vmatpush1.bf16.msra.mxu0 %v447
      %501 = vmatprep.subr.bf16.mxu0 0
      %502 = vmatpush1.bf16.msra.mxu0 %v448
      %503 = vmatprep.subr.bf16.mxu0 0
      %504 = vmatpush1.bf16.msra.mxu0 %v449
      %505 = vmatprep.subr.bf16.mxu0 0
      %506 = vmatpush1.bf16.msra.mxu0 %v450
      %507 = vmatprep.subr.bf16.mxu0 0
      %508 = vmatpush1.bf16.msra.mxu0 %v451
      %509 = vmatprep.subr.bf16.mxu0 0
      %510 = vmatpush1.bf16.msra.mxu0 %v452
      %511 = vmatprep.subr.bf16.mxu0 0
      %512 = vmatpush1.bf16.msra.mxu0 %v453
      %513 = vmatprep.subr.bf16.mxu0 0
      %514 = vmatpush1.bf16.msra.mxu0 %v454
      %515 = vmatprep.subr.bf16.mxu0 0
      %516 = vmatpush1.bf16.msra.mxu0 %v455
      %517 = vmatprep.subr.bf16.mxu0 0
      %518 = vmatpush1.bf16.msra.mxu0 %v456
      %519 = vmatprep.subr.bf16.mxu0 0
      %520 = vmatpush1.bf16.msra.mxu0 %v457
      %521 = vmatprep.subr.bf16.mxu0 0
      %522 = vmatpush1.bf16.msra.mxu0 %v497
      %523 = vmatprep.subr.bf16.mxu0 0
      %524 = vmatpush1.bf16.msra.mxu0 0
      %525 = vmatprep.subr.bf16.mxu0 0
      %526 = vmatpush1.bf16.msra.mxu0 0
      %527 = vmatprep.subr.bf16.mxu0 0
      %528 = vmatpush1.bf16.msra.mxu0 0
      %529 = vmatprep.subr.bf16.mxu0 0
      %530 = vmatpush1.bf16.msra.mxu0 0
      %531 = vmatprep.mubr.bf16.mxu0 %v472
      %532 = vmatmul.mubr.bf16.gmra.mrb[0].mxu0 %v377
      %v533 = vpop.f32.mrb[0].mxu0
      %v534 = vadd.f32 %v327, %v533
      %v535 = vpop.f32.mrb[0].mxu0
      %v536 = vpop.f32.mrb[0].mxu0
      %v537 = vadd.f32 %v327, %v536
      %v538 = vpop.f32.mrb[0].mxu0
      %539 = vmatprep.mubr.bf16.mxu0 %v475
      %540 = vmatmul.mubr.bf16.gmra.mrb[0].mxu0 %v379
      %v541 = vpop.f32.mrb[0].mxu0
      %v542 = vadd.f32 %v327, %v541
      %v543 = vpop.f32.mrb[0].mxu0
      %v544 = vpop.f32.mrb[0].mxu0
      %v545 = vadd.f32 %v327, %v544
      %v546 = vpop.f32.mrb[0].mxu0
      %547 = vmatprep.mubr.bf16.mxu0 %v478
      %548 = vmatmul.mubr.bf16.gmra.mrb[0].mxu0 %v381
      %v549 = vpop.f32.mrb[0].mxu0
      %v550 = vadd.f32 %v327, %v549
      %v551 = vpop.f32.mrb[0].mxu0
      %v552 = vpop.f32.mrb[0].mxu0
      %v553 = vadd.f32 %v327, %v552
      %v554 = vpop.f32.mrb[0].mxu0
      %555 = vmatprep.mubr.bf16.mxu0 %v481
      %556 = vmatmul.mubr.bf16.gmra.mrb[0].mxu0 %v383
      %v557 = vpop.f32.mrb[0].mxu0
      %v558 = vadd.f32 %v327, %v557
      %v559 = vpop.f32.mrb[0].mxu0
      %v560 = vpop.f32.mrb[0].mxu0
      %v561 = vadd.f32 %v327, %v560
      %v562 = vpop.f32.mrb[0].mxu0
      %563 = vmatprep.mubr.bf16.mxu0 %v484
      %564 = vmatmul.mubr.bf16.gmra.mrb[0].mxu0 %v385
      %v565 = vpop.f32.mrb[0].mxu0
      %v566 = vadd.f32 %v327, %v565
      %v567 = vpop.f32.mrb[0].mxu0
      %v568 = vpop.f32.mrb[0].mxu0
      %v569 = vadd.f32 %v327, %v568
      %v570 = vpop.f32.mrb[0].mxu0
      %571 = vmatprep.mubr.bf16.mxu0 %v487
      %572 = vmatmul.mubr.bf16.gmra.mrb[0].mxu0 %v387
      %v573 = vpop.f32.mrb[0].mxu0
      %v574 = vadd.f32 %v327, %v573
      %v575 = vpop.f32.mrb[0].mxu0
      %v576 = vpop.f32.mrb[0].mxu0
      %v577 = vadd.f32 %v327, %v576
      %v578 = vpop.f32.mrb[0].mxu0
      %579 = vmatprep.mubr.bf16.mxu0 %v490
      %580 = vmatmul.mubr.bf16.gmra.mrb[0].mxu0 %v389
      %v581 = vpop.f32.mrb[0].mxu0
      %v582 = vadd.f32 %v327, %v581
      %v583 = vpop.f32.mrb[0].mxu0
      %v584 = vpop.f32.mrb[0].mxu0
      %v585 = vadd.f32 %v327, %v584
      %v586 = vpop.f32.mrb[0].mxu0
      %587 = vmatprep.mubr.bf16.mxu0 %v493
      %588 = vmatmul.mubr.bf16.gmra.mrb[0].mxu0 %v391
      %v589 = vpop.f32.mrb[0].mxu0
      %v590 = vadd.f32 %v327, %v589
      %v591 = vpop.f32.mrb[0].mxu0
      %v592 = vpop.f32.mrb[0].mxu0
      %v593 = vadd.f32 %v327, %v592
      %v594 = vpop.f32.mrb[0].mxu0
      %595 = vdwg.mxu0
      %v596 = vmax.f32 %v534, 0.0
      %v597 = vmax.f32 %v537, 0.0
      %v598 = vmax.f32 %v542, 0.0
      %v599 = vmax.f32 %v545, 0.0
      %v600 = vmax.f32 %v550, 0.0
      %v601 = vmax.f32 %v553, 0.0
      %v602 = vmax.f32 %v558, 0.0
      %v603 = vmax.f32 %v561, 0.0
      %v604 = vmax.f32 %v566, 0.0
      %v605 = vmax.f32 %v569, 0.0
      %v606 = vmax.f32 %v574, 0.0
      %v607 = vmax.f32 %v577, 0.0
      %v608 = vmax.f32 %v582, 0.0
      %v609 = vmax.f32 %v585, 0.0
      %v610 = vmax.f32 %v590, 0.0
      %v611 = vmax.f32 %v593, 0.0
      %v612 = vpack.c.bf16 %v597, %v596
      %v613 = vpack.c.bf16 %v599, %v598
      %v614 = vpack.c.bf16 %v601, %v600
      %v615 = vpack.c.bf16 %v603, %v602
      %v616 = vpack.c.bf16 %v605, %v604
      %v617 = vpack.c.bf16 %v607, %v606
      %v618 = vpack.c.bf16 %v609, %v608
      %v619 = vpack.c.bf16 %v611, %v610
      %v620 = vld [vmem:[%s3] sm:$0xf]
      %v621 = vld [vmem:[%s3 + $0x4] sm:$0xf]
      %v622 = vld [vmem:[%s3 + $0x8] sm:$0xf]
      %v623 = vld [vmem:[%s3 + $0xc] sm:$0xf]
      %v624 = vld [vmem:[%s3 + $0x10] sm:$0xf]
      %v625 = vld [vmem:[%s3 + $0x14] sm:$0xf]
      %v626 = vld [vmem:[%s3 + $0x18] sm:$0xf]
      %v627 = vld [vmem:[%s3 + $0x1c] sm:$0xf]
      %v628 = vld [vmem:[%s3 + $0x20] sm:$0xf]
      %v629 = vld [vmem:[%s3 + $0x24] sm:$0xf]
      %v630 = vld [vmem:[%s3 + $0x28] sm:$0xf]
      %v631 = vld [vmem:[%s3 + $0x2c] sm:$0xf]
      %v632 = vld [vmem:[%s3 + $0x30] sm:$0xf]
      %v633 = vld [vmem:[%s3 + $0x34] sm:$0xf]
      %v634 = vld [vmem:[%s3 + $0x38] sm:$0xf]
      %v635 = vld [vmem:[%s4] sm:$0x1]
      %v637 = vlaneseq
      %v638 = vshrl.u32 %v637, 7
      %v639 = vsub.s32 0, %v638
      %v640 = vrot.slane %v635, %v639
      %v657 = vunpack.c.l.b16 %v620
      %v658 = vunpack.c.l.b16 %v621
      %v659 = vunpack.c.l.b16 %v622
      %v660 = vunpack.c.l.b16 %v623
      %v661 = vunpack.c.l.b16 %v624
      %v662 = vunpack.c.l.b16 %v625
      %v663 = vunpack.c.l.b16 %v626
      %v664 = vunpack.c.l.b16 %v627
      %v665 = vunpack.c.l.b16 %v628
      %v666 = vunpack.c.l.b16 %v629
      %v667 = vunpack.c.l.b16 %v630
      %v668 = vunpack.c.l.b16 %v631
      %v669 = vunpack.c.l.b16 %v632
      %v670 = vunpack.c.l.b16 %v633
      %v671 = vunpack.c.l.b16 %v634
      %v672 = vpack.c.b16 %v658, %v657
      %v673 = vpack.c.b16 %v660, %v659
      %v674 = vpack.c.b16 %v662, %v661
      %v675 = vpack.c.b16 %v664, %v663
      %v676 = vpack.c.b16 %v666, %v665
      %v677 = vpack.c.b16 %v668, %v667
      %v678 = vpack.c.b16 %v670, %v669
      %v679 = vpack.c.b16 %v671, %v671
      %vm687 = vcmask 982016
      %v689 = vsel %vm687, %v612, 0
      %v692 = vsel %vm687, %v613, 0
      %v695 = vsel %vm687, %v614, 0
      %v698 = vsel %vm687, %v615, 0
      %v701 = vsel %vm687, %v616, 0
      %v704 = vsel %vm687, %v617, 0
      %v707 = vsel %vm687, %v618, 0
      %v710 = vsel %vm687, %v619, 0
      %vm712 = vcmask 1043456
      %v714 = vsel %vm712, %v679, 0
      %716 = vmatprep.subr.bf16.mxu0 0
      %717 = vmatpush1.bf16.msra.mxu0 %v672
      %718 = vmatprep.subr.bf16.mxu0 0
      %719 = vmatpush1.bf16.msra.mxu0 %v673
      %720 = vmatprep.subr.bf16.mxu0 0
      %721 = vmatpush1.bf16.msra.mxu0 %v674
      %722 = vmatprep.subr.bf16.mxu0 0
      %723 = vmatpush1.bf16.msra.mxu0 %v675
      %724 = vmatprep.subr.bf16.mxu0 0
      %725 = vmatpush1.bf16.msra.mxu0 %v676
      %726 = vmatprep.subr.bf16.mxu0 0
      %727 = vmatpush1.bf16.msra.mxu0 %v677
      %728 = vmatprep.subr.bf16.mxu0 0
      %729 = vmatpush1.bf16.msra.mxu0 %v678
      %730 = vmatprep.subr.bf16.mxu0 0
      %731 = vmatpush1.bf16.msra.mxu0 %v714
      %732 = vmatprep.subr.bf16.mxu0 0
      %733 = vmatpush1.bf16.msra.mxu0 0
      %734 = vmatprep.subr.bf16.mxu0 0
      %735 = vmatpush1.bf16.msra.mxu0 0
      %736 = vmatprep.subr.bf16.mxu0 0
      %737 = vmatpush1.bf16.msra.mxu0 0
      %738 = vmatprep.subr.bf16.mxu0 0
      %739 = vmatpush1.bf16.msra.mxu0 0
      %740 = vmatprep.subr.bf16.mxu0 0
      %741 = vmatpush1.bf16.msra.mxu0 0
      %742 = vmatprep.subr.bf16.mxu0 0
      %743 = vmatpush1.bf16.msra.mxu0 0
      %744 = vmatprep.subr.bf16.mxu0 0
      %745 = vmatpush1.bf16.msra.mxu0 0
      %746 = vmatprep.subr.bf16.mxu0 0
      %747 = vmatpush1.bf16.msra.mxu0 0
      %748 = vmatprep.mubr.bf16.mxu0 0
      %749 = vmatmul.mubr.bf16.gmra.mrb[0].mxu0 %v689
      %v750 = vpop.f32.mrb[0].mxu0
      %v751 = vadd.f32 %v640, %v750
      %v752 = vpop.f32.mrb[0].mxu0
      %v753 = vpop.f32.mrb[0].mxu0
      %v754 = vadd.f32 %v640, %v753
      %v755 = vpop.f32.mrb[0].mxu0
      %756 = vmatprep.mubr.bf16.mxu0 0
      %757 = vmatmul.mubr.bf16.gmra.mrb[0].mxu0 %v692
      %v758 = vpop.f32.mrb[0].mxu0
      %v759 = vadd.f32 %v640, %v758
      %v760 = vpop.f32.mrb[0].mxu0
      %v761 = vpop.f32.mrb[0].mxu0
      %v762 = vadd.f32 %v640, %v761
      %v763 = vpop.f32.mrb[0].mxu0
      %764 = vmatprep.mubr.bf16.mxu0 0
      %765 = vmatmul.mubr.bf16.gmra.mrb[0].mxu0 %v695
      %v766 = vpop.f32.mrb[0].mxu0
      %v767 = vadd.f32 %v640, %v766
      %v768 = vpop.f32.mrb[0].mxu0
      %v769 = vpop.f32.mrb[0].mxu0
      %v770 = vadd.f32 %v640, %v769
      %v771 = vpop.f32.mrb[0].mxu0
      %772 = vmatprep.mubr.bf16.mxu0 0
      %773 = vmatmul.mubr.bf16.gmra.mrb[0].mxu0 %v698
      %v774 = vpop.f32.mrb[0].mxu0
      %v775 = vadd.f32 %v640, %v774
      %v776 = vpop.f32.mrb[0].mxu0
      %v777 = vpop.f32.mrb[0].mxu0
      %v778 = vadd.f32 %v640, %v777
      %v779 = vpop.f32.mrb[0].mxu0
      %780 = vmatprep.mubr.bf16.mxu0 0
      %781 = vmatmul.mubr.bf16.gmra.mrb[0].mxu0 %v701
      %v782 = vpop.f32.mrb[0].mxu0
      %v783 = vadd.f32 %v640, %v782
      %v784 = vpop.f32.mrb[0].mxu0
      %v785 = vpop.f32.mrb[0].mxu0
      %v786 = vadd.f32 %v640, %v785
      %v787 = vpop.f32.mrb[0].mxu0
      %788 = vmatprep.mubr.bf16.mxu0 0
      %789 = vmatmul.mubr.bf16.gmra.mrb[0].mxu0 %v704
      %v790 = vpop.f32.mrb[0].mxu0
      %v791 = vadd.f32 %v640, %v790
      %v792 = vpop.f32.mrb[0].mxu0
      %v793 = vpop.f32.mrb[0].mxu0
      %v794 = vadd.f32 %v640, %v793
      %v795 = vpop.f32.mrb[0].mxu0
      %796 = vmatprep.mubr.bf16.mxu0 0
      %797 = vmatmul.mubr.bf16.gmra.mrb[0].mxu0 %v707
      %v798 = vpop.f32.mrb[0].mxu0
      %v799 = vadd.f32 %v640, %v798
      %v800 = vpop.f32.mrb[0].mxu0
      %v801 = vpop.f32.mrb[0].mxu0
      %v802 = vadd.f32 %v640, %v801
      %v803 = vpop.f32.mrb[0].mxu0
      %804 = vmatprep.mubr.bf16.mxu0 0
      %805 = vmatmul.mubr.bf16.gmra.mrb[0].mxu0 %v710
      %v806 = vpop.f32.mrb[0].mxu0
      %v807 = vadd.f32 %v640, %v806
      %v808 = vpop.f32.mrb[0].mxu0
      %v809 = vpop.f32.mrb[0].mxu0
      %v810 = vadd.f32 %v640, %v809
      %v811 = vpop.f32.mrb[0].mxu0
      %812 = vdwg.mxu0
      %v813 = vmax.f32 %v751, 0.0
      %v814 = vmax.f32 %v754, 0.0
      %v815 = vmax.f32 %v759, 0.0
      %v816 = vmax.f32 %v762, 0.0
      %v817 = vmax.f32 %v767, 0.0
      %v818 = vmax.f32 %v770, 0.0
      %v819 = vmax.f32 %v775, 0.0
      %v820 = vmax.f32 %v778, 0.0
      %v821 = vmax.f32 %v783, 0.0
      %v822 = vmax.f32 %v786, 0.0
      %v823 = vmax.f32 %v791, 0.0
      %v824 = vmax.f32 %v794, 0.0
      %v825 = vmax.f32 %v799, 0.0
      %v826 = vmax.f32 %v802, 0.0
      %v827 = vmax.f32 %v807, 0.0
      %v828 = vmax.f32 %v810, 0.0
      %v829 = vld [vmem:[%s5] sm:$0x1]
      %v831 = vlaneseq
      %v832 = vshrl.u32 %v831, 7
      %v833 = vsub.s32 0, %v832
      %v834 = vrot.slane %v829, %v833
      %v836 = vmul.f32 %v813, %v834
      %v837 = vmul.f32 %v814, %v834
      %v838 = vmul.f32 %v815, %v834
      %v839 = vmul.f32 %v816, %v834
      %v840 = vmul.f32 %v817, %v834
      %v841 = vmul.f32 %v818, %v834
      %v842 = vmul.f32 %v819, %v834
      %v843 = vmul.f32 %v820, %v834
      %v844 = vmul.f32 %v821, %v834
      %v845 = vmul.f32 %v822, %v834
      %v846 = vmul.f32 %v823, %v834
      %v847 = vmul.f32 %v824, %v834
      %v848 = vmul.f32 %v825, %v834
      %v849 = vmul.f32 %v826, %v834
      %v850 = vmul.f32 %v827, %v834
      %v851 = vmul.f32 %v828, %v834
      %vm852 = vcmask 490496
      %v853 = vsel %vm852, %v836, 0.0
      %854 = vadd.xlane.f32.xlu0 %v853
      %v855 = vpop.xlane.xlu0 %854
      %v856 = vsel %vm852, %v837, 0.0
      %857 = vadd.xlane.f32.xlu0 %v856
      %v858 = vpop.xlane.xlu0 %857
      %v859 = vsel %vm852, %v838, 0.0
      %860 = vadd.xlane.f32.xlu0 %v859
      %v861 = vpop.xlane.xlu0 %860
      %v862 = vsel %vm852, %v839, 0.0
      %863 = vadd.xlane.f32.xlu0 %v862
      %v864 = vpop.xlane.xlu0 %863
      %v865 = vsel %vm852, %v840, 0.0
      %866 = vadd.xlane.f32.xlu0 %v865
      %v867 = vpop.xlane.xlu0 %866
      %v868 = vsel %vm852, %v841, 0.0
      %869 = vadd.xlane.f32.xlu0 %v868
      %v870 = vpop.xlane.xlu0 %869
      %v871 = vsel %vm852, %v842, 0.0
      %872 = vadd.xlane.f32.xlu0 %v871
      %v873 = vpop.xlane.xlu0 %872
      %v874 = vsel %vm852, %v843, 0.0
      %875 = vadd.xlane.f32.xlu0 %v874
      %v876 = vpop.xlane.xlu0 %875
      %v877 = vsel %vm852, %v844, 0.0
      %878 = vadd.xlane.f32.xlu0 %v877
      %v879 = vpop.xlane.xlu0 %878
      %v880 = vsel %vm852, %v845, 0.0
      %881 = vadd.xlane.f32.xlu0 %v880
      %v882 = vpop.xlane.xlu0 %881
      %v883 = vsel %vm852, %v846, 0.0
      %884 = vadd.xlane.f32.xlu0 %v883
      %v885 = vpop.xlane.xlu0 %884
      %v886 = vsel %vm852, %v847, 0.0
      %887 = vadd.xlane.f32.xlu0 %v886
      %v888 = vpop.xlane.xlu0 %887
      %v889 = vsel %vm852, %v848, 0.0
      %890 = vadd.xlane.f32.xlu0 %v889
      %v891 = vpop.xlane.xlu0 %890
      %v892 = vsel %vm852, %v849, 0.0
      %893 = vadd.xlane.f32.xlu0 %v892
      %v894 = vpop.xlane.xlu0 %893
      %v895 = vsel %vm852, %v850, 0.0
      %896 = vadd.xlane.f32.xlu0 %v895
      %v897 = vpop.xlane.xlu0 %896
      %v898 = vsel %vm852, %v851, 0.0
      %899 = vadd.xlane.f32.xlu0 %v898
      %v900 = vpop.xlane.xlu0 %899
      %v901 = vld [vmem:[#allocation2] sm:$0x1]
      %903 = vset.pattern.permute.xlu0 0
      %904 = vperm.xlu0 %903, %v901
      %v905 = vpop.permute.xlu0 %904
      %v907 = vlaneseq
      %v908 = vshrl.u32 %v907, 7
      %v909 = vsub.s32 0, %v908
      %v910 = vrot.slane %v905, %v909
      %v911 = vadd.f32 %v855, %v910
      %v912 = vadd.f32 %v858, %v910
      %v913 = vadd.f32 %v861, %v910
      %v914 = vadd.f32 %v864, %v910
      %v915 = vadd.f32 %v867, %v910
      %v916 = vadd.f32 %v870, %v910
      %v917 = vadd.f32 %v873, %v910
      %v918 = vadd.f32 %v876, %v910
      %v919 = vadd.f32 %v879, %v910
      %v920 = vadd.f32 %v882, %v910
      %v921 = vadd.f32 %v885, %v910
      %v922 = vadd.f32 %v888, %v910
      %v923 = vadd.f32 %v891, %v910
      %v924 = vadd.f32 %v894, %v910
      %v925 = vadd.f32 %v897, %v910
      %v926 = vadd.f32 %v900, %v910
      %v927 = vxor.u32 %v911, 2147483648
      %v928 = vxor.u32 %v912, 2147483648
      %v929 = vxor.u32 %v913, 2147483648
      %v930 = vxor.u32 %v914, 2147483648
      %v931 = vxor.u32 %v915, 2147483648
      %v932 = vxor.u32 %v916, 2147483648
      %v933 = vxor.u32 %v917, 2147483648
      %v934 = vxor.u32 %v918, 2147483648
      %v935 = vxor.u32 %v919, 2147483648
      %v936 = vxor.u32 %v920, 2147483648
      %v937 = vxor.u32 %v921, 2147483648
      %v938 = vxor.u32 %v922, 2147483648
      %v939 = vxor.u32 %v923, 2147483648
      %v940 = vxor.u32 %v924, 2147483648
      %v941 = vxor.u32 %v925, 2147483648
      %v942 = vxor.u32 %v926, 2147483648
      %v943 = vmul.f32 %v927, 1.442695
      %v944 = vpow.pop %v943
      %v945 = vmul.f32 %v928, 1.442695
      %v946 = vpow.pop %v945
      %v947 = vmul.f32 %v929, 1.442695
      %v948 = vpow.pop %v947
      %v949 = vmul.f32 %v930, 1.442695
      %v950 = vpow.pop %v949
      %v951 = vmul.f32 %v931, 1.442695
      %v952 = vpow.pop %v951
      %v953 = vmul.f32 %v932, 1.442695
      %v954 = vpow.pop %v953
      %v955 = vmul.f32 %v933, 1.442695
      %v956 = vpow.pop %v955
      %v957 = vmul.f32 %v934, 1.442695
      %v958 = vpow.pop %v957
      %v959 = vmul.f32 %v935, 1.442695
      %v960 = vpow.pop %v959
      %v961 = vmul.f32 %v936, 1.442695
      %v962 = vpow.pop %v961
      %v963 = vmul.f32 %v937, 1.442695
      %v964 = vpow.pop %v963
      %v965 = vmul.f32 %v938, 1.442695
      %v966 = vpow.pop %v965
      %v967 = vmul.f32 %v939, 1.442695
      %v968 = vpow.pop %v967
      %v969 = vmul.f32 %v940, 1.442695
      %v970 = vpow.pop %v969
      %v971 = vmul.f32 %v941, 1.442695
      %v972 = vpow.pop %v971
      %v973 = vmul.f32 %v942, 1.442695
      %v974 = vpow.pop %v973
      %v975 = vadd.f32 %v944, 1.0
      %v976 = vadd.f32 %v946, 1.0
      %v977 = vadd.f32 %v948, 1.0
      %v978 = vadd.f32 %v950, 1.0
      %v979 = vadd.f32 %v952, 1.0
      %v980 = vadd.f32 %v954, 1.0
      %v981 = vadd.f32 %v956, 1.0
      %v982 = vadd.f32 %v958, 1.0
      %v983 = vadd.f32 %v960, 1.0
      %v984 = vadd.f32 %v962, 1.0
      %v985 = vadd.f32 %v964, 1.0
      %v986 = vadd.f32 %v966, 1.0
      %v987 = vadd.f32 %v968, 1.0
      %v988 = vadd.f32 %v970, 1.0
      %v989 = vadd.f32 %v972, 1.0
      %v990 = vadd.f32 %v974, 1.0
      %v991 = vrcp.pop %v975
      %v992 = vmul.f32 1.0, %v991
      %v993 = vrcp.pop %v976
      %v994 = vmul.f32 1.0, %v993
      %v995 = vrcp.pop %v977
      %v996 = vmul.f32 1.0, %v995
      %v997 = vrcp.pop %v978
      %v998 = vmul.f32 1.0, %v997
      %v999 = vrcp.pop %v979
      %v1000 = vmul.f32 1.0, %v999
      %v1001 = vrcp.pop %v980
      %v1002 = vmul.f32 1.0, %v1001
      %v1003 = vrcp.pop %v981
      %v1004 = vmul.f32 1.0, %v1003
      %v1005 = vrcp.pop %v982
      %v1006 = vmul.f32 1.0, %v1005
      %v1007 = vrcp.pop %v983
      %v1008 = vmul.f32 1.0, %v1007
      %v1009 = vrcp.pop %v984
      %v1010 = vmul.f32 1.0, %v1009
      %v1011 = vrcp.pop %v985
      %v1012 = vmul.f32 1.0, %v1011
      %v1013 = vrcp.pop %v986
      %v1014 = vmul.f32 1.0, %v1013
      %v1015 = vrcp.pop %v987
      %v1016 = vmul.f32 1.0, %v1015
      %v1017 = vrcp.pop %v988
      %v1018 = vmul.f32 1.0, %v1017
      %v1019 = vrcp.pop %v989
      %v1020 = vmul.f32 1.0, %v1019
      %v1021 = vrcp.pop %v990
      %v1022 = vmul.f32 1.0, %v1021
      %v1039 = vlaneseq
      %v1040 = vand.u32 %v1039, 127
      %v1041 = vlaneseq
      %v1042 = vshrl.u32 %v1041, 7
      %v1043 = vsub.s32 %v1040, %v1042
      %v1044 = vrot.slane %v992, %v1043
      %v1045 = vadd.s32 %v1040, 4294967288
      %v1046 = vlaneseq
      %v1047 = vshrl.u32 %v1046, 7
      %v1048 = vsub.s32 %v1045, %v1047
      %v1049 = vrot.slane %v994, %v1048
      %vm1050 = vcmask 130112
      %v1051 = vsel %vm1050, %v1049, %v1044
      %v1052 = vadd.s32 %v1040, 4294967280
      %v1053 = vlaneseq
      %v1054 = vshrl.u32 %v1053, 7
      %v1055 = vsub.s32 %v1052, %v1054
      %v1056 = vrot.slane %v996, %v1055
      %vm1057 = vcmask 195712
      %v1058 = vsel %vm1057, %v1056, %v1051
      %v1059 = vadd.s32 %v1040, 4294967272
      %v1060 = vlaneseq
      %v1061 = vshrl.u32 %v1060, 7
      %v1062 = vsub.s32 %v1059, %v1061
      %v1063 = vrot.slane %v998, %v1062
      %vm1064 = vcmask 261312
      %v1065 = vsel %vm1064, %v1063, %v1058
      %v1066 = vadd.s32 %v1040, 4294967264
      %v1067 = vlaneseq
      %v1068 = vshrl.u32 %v1067, 7
      %v1069 = vsub.s32 %v1066, %v1068
      %v1070 = vrot.slane %v1000, %v1069
      %vm1071 = vcmask 326912
      %v1072 = vsel %vm1071, %v1070, %v1065
      %v1073 = vadd.s32 %v1040, 4294967256
      %v1074 = vlaneseq
      %v1075 = vshrl.u32 %v1074, 7
      %v1076 = vsub.s32 %v1073, %v1075
      %v1077 = vrot.slane %v1002, %v1076
      %vm1078 = vcmask 392512
      %v1079 = vsel %vm1078, %v1077, %v1072
      %v1080 = vadd.s32 %v1040, 4294967248
      %v1081 = vlaneseq
      %v1082 = vshrl.u32 %v1081, 7
      %v1083 = vsub.s32 %v1080, %v1082
      %v1084 = vrot.slane %v1004, %v1083
      %vm1085 = vcmask 458112
      %v1086 = vsel %vm1085, %v1084, %v1079
      %v1087 = vadd.s32 %v1040, 4294967240
      %v1088 = vlaneseq
      %v1089 = vshrl.u32 %v1088, 7
      %v1090 = vsub.s32 %v1087, %v1089
      %v1091 = vrot.slane %v1006, %v1090
      %vm1092 = vcmask 523712
      %v1093 = vsel %vm1092, %v1091, %v1086
      %v1094 = vadd.s32 %v1040, 4294967232
      %v1095 = vlaneseq
      %v1096 = vshrl.u32 %v1095, 7
      %v1097 = vsub.s32 %v1094, %v1096
      %v1098 = vrot.slane %v1008, %v1097
      %vm1099 = vcmask 589312
      %v1100 = vsel %vm1099, %v1098, %v1093
      %v1101 = vadd.s32 %v1040, 4294967224
      %v1102 = vlaneseq
      %v1103 = vshrl.u32 %v1102, 7
      %v1104 = vsub.s32 %v1101, %v1103
      %v1105 = vrot.slane %v1010, %v1104
      %vm1106 = vcmask 654912
      %v1107 = vsel %vm1106, %v1105, %v1100
      %v1108 = vadd.s32 %v1040, 4294967216
      %v1109 = vlaneseq
      %v1110 = vshrl.u32 %v1109, 7
      %v1111 = vsub.s32 %v1108, %v1110
      %v1112 = vrot.slane %v1012, %v1111
      %vm1113 = vcmask 720512
      %v1114 = vsel %vm1113, %v1112, %v1107
      %v1115 = vadd.s32 %v1040, 4294967208
      %v1116 = vlaneseq
      %v1117 = vshrl.u32 %v1116, 7
      %v1118 = vsub.s32 %v1115, %v1117
      %v1119 = vrot.slane %v1014, %v1118
      %vm1120 = vcmask 786112
      %v1121 = vsel %vm1120, %v1119, %v1114
      %v1122 = vadd.s32 %v1040, 4294967200
      %v1123 = vlaneseq
      %v1124 = vshrl.u32 %v1123, 7
      %v1125 = vsub.s32 %v1122, %v1124
      %v1126 = vrot.slane %v1016, %v1125
      %vm1127 = vcmask 851712
      %v1128 = vsel %vm1127, %v1126, %v1121
      %v1129 = vadd.s32 %v1040, 4294967192
      %v1130 = vlaneseq
      %v1131 = vshrl.u32 %v1130, 7
      %v1132 = vsub.s32 %v1129, %v1131
      %v1133 = vrot.slane %v1018, %v1132
      %vm1134 = vcmask 917312
      %v1135 = vsel %vm1134, %v1133, %v1128
      %v1136 = vadd.s32 %v1040, 4294967184
      %v1137 = vlaneseq
      %v1138 = vshrl.u32 %v1137, 7
      %v1139 = vsub.s32 %v1136, %v1138
      %v1140 = vrot.slane %v1020, %v1139
      %vm1141 = vcmask 982912
      %v1142 = vsel %vm1141, %v1140, %v1135
      %v1143 = vadd.s32 %v1040, 4294967176
      %v1144 = vlaneseq
      %v1145 = vshrl.u32 %v1144, 7
      %v1146 = vsub.s32 %v1143, %v1145
      %v1147 = vrot.slane %v1022, %v1146
      %vm1148 = vcmask 1048512
      %v1149 = vsel %vm1148, %v1147, %v1142
      %1151 = vst [vmem:[%s281] sm:$0x1] %v1149
      %p1152 = scmp.lt.s32.totalorder %s20, 2
      %s1153 = scalar_select %p1152, %s20, 2
      %s1154 = scalar_lea.vmem %s7, %s1153
      // Predicated region
      $region49: #{network_forward_pallas.1} parent=47 // pred_check
        %p1155 = pneg %p190
      $region50: #{network_forward_pallas.1} parent=47 // pred_check_branch
        %1157 = sbr.rel (%p1155) target = $region52
      $region51: #{network_forward_pallas.1} parent=47 // pred_region
        _
      $region52: #{network_forward_pallas.1} parent=47 // pred_fallthru
        _
    $region48: #{network_forward_pallas.1} parent=5 // pred_fallthru
      _
    %p1158 = scmp.le.s32.totalorder 2, %s15
    // Predicated region
    $region53: #{network_forward_pallas.1} parent=5 // pred_check
      %p1159 = pneg %p1158
    $region54: #{network_forward_pallas.1} parent=5 // pred_check_branch
      %1161 = sbr.rel (%p1159) target = $region56
    $region55: #{network_forward_pallas.1} parent=5 // pred_region
      %s1162 = ssub.s32 %s15, 2
      // Predicated region
      $region57: #{network_forward_pallas.1} parent=55 // pred_check
        %p1163 = pneg %p196
      $region58: #{network_forward_pallas.1} parent=55 // pred_check_branch
        %1165 = sbr.rel (%p1163) target = $region60
      $region59: #{network_forward_pallas.1} parent=55 // pred_region
        %p1166 = scmp.lt.s32.totalorder %s21, 2
        %s1167 = scalar_select %p1166, %s21, 2
        %s1168 = scalar_lea.vmem %s7, %s1167
      $region60: #{network_forward_pallas.1} parent=55 // pred_fallthru
        _
    $region56: #{network_forward_pallas.1} parent=5 // pred_fallthru
      _
  $region6: #{network_forward_pallas.1} parent=0 // loop_footer
    %s19 = sadd.s32 1, %s15
  $region7: #{network_forward_pallas.1} parent=0 // loop_footer_branch
    %14 = sbr.rel target = $region3
  $region8: #{network_forward_pallas.1} parent=0 // loop_exit
    _

</llo_original>
